<compile_context>
chip_gen: v7x
topology: tpu7x:2x2x1
jax: 0.10.0
libtpu: 0.0.40
codegen_flags: <defaults>
</compile_context>

<pallas_src>
import jax
import jax.numpy as jnp
from jax.experimental import pallas as pl
from jax.experimental.pallas import tpu as pltpu


def _round_up(n, m):
    return ((n + m - 1) // m) * m


def _mlp_kernel(x_ref, w1_ref, b1_ref, w2_ref, b2_ref, o_ref):
    # Transposed layout: batch lives on the lane (last) axis.
    #   x_ref : (64, TB)  compute dtype (bf16 by default)
    #   w1_ref: (32, 64)  compute dtype     b1_ref: (32, 1) f32
    #   w2_ref: (10, 32)  compute dtype     b2_ref: (10, 1) f32
    #   o_ref : (10, TB)  f32
    h = jnp.dot(w1_ref[...], x_ref[...], preferred_element_type=jnp.float32)  # (32, TB) f32
    h = jnp.maximum(h + b1_ref[...], 0.0)        # bias + ReLU in f32 (v5e-safe)
    h = h.astype(w2_ref.dtype)                   # back to compute dtype for the MXU
    y = jnp.dot(w2_ref[...], h, preferred_element_type=jnp.float32)           # (10, TB) f32
    o_ref[...] = y + b2_ref[...]                 # output already f32; no extra astype


def digit_classifier_forward(x, w1, b1, w2, b2, *, block_batch=1024,
                             compute_dtype=jnp.bfloat16):
    """Forward pass of DigitClassifier.

    x : (B, 64) f32  (same input as the PyTorch module)
    w1: (32, 64), b1: (32,)   -- PyTorch nn.Linear fc1 parameter layout
    w2: (10, 32), b2: (10,)   -- PyTorch nn.Linear fc2 parameter layout
    returns (B, 10) f32 logits.
    """
    B, F = x.shape
    assert F == 64 and w1.shape == (32, 64) and w2.shape == (10, 32)

    # Batch tile: multiple of 128 (lane width), capped by the padded batch size.
    tb = min(_round_up(block_batch, 128), _round_up(B, 128))
    pb = _round_up(B, tb)           # padded batch
    grid = (pb // tb,)

    # Layout plumbing in the wrapper (free): transpose + zero-pad so batch is lanes.
    x_t = jnp.pad(x.T.astype(compute_dtype), ((0, 0), (0, pb - B)))
    w1c = w1.astype(compute_dtype)
    w2c = w2.astype(compute_dtype)
    b1c = b1.reshape(32, 1).astype(jnp.float32)
    b2c = b2.reshape(10, 1).astype(jnp.float32)

    itemsize = jnp.dtype(compute_dtype).itemsize
    cost = pl.CostEstimate(
        flops=2 * pb * (64 * 32 + 32 * 10),
        transcendentals=0,
        bytes_accessed=(pb * 64 * itemsize               # x read
                        + pb * 10 * 4                    # out write
                        + (32 * 64 + 10 * 32) * itemsize # weights
                        + (32 + 10) * 4))                # biases

    out_t = pl.pallas_call(
        _mlp_kernel,
        out_shape=jax.ShapeDtypeStruct((10, pb), jnp.float32),
        grid=grid,
        in_specs=[
            pl.BlockSpec((64, tb), lambda i: (0, i)),   # x tile (pipelined)
            pl.BlockSpec((32, 64), lambda i: (0, 0)),   # w1 (resident)
            pl.BlockSpec((32, 1), lambda i: (0, 0)),    # b1 (resident)
            pl.BlockSpec((10, 32), lambda i: (0, 0)),   # w2 (resident)
            pl.BlockSpec((10, 1), lambda i: (0, 0)),    # b2 (resident)
        ],
        out_specs=pl.BlockSpec((10, tb), lambda i: (0, i)),  # lane-dense store
        compiler_params=pltpu.CompilerParams(
            dimension_semantics=("parallel",)),
        cost_estimate=cost,
    )(x_t, w1c, b1c, w2c, b2c)

    return out_t[:, :B].T                               # back to (B, 10)


def init_params(key):
    """PyTorch nn.Linear default init: U[-1/sqrt(fan_in), 1/sqrt(fan_in)], native layout."""
    k1, k2, k3, k4 = jax.random.split(key, 4)
    bound1 = 1.0 / jnp.sqrt(64.0)
    bound2 = 1.0 / jnp.sqrt(32.0)
    w1 = jax.random.uniform(k1, (32, 64), jnp.float32, -bound1, bound1)  # fc1.weight
    b1 = jax.random.uniform(k2, (32,), jnp.float32, -bound1, bound1)     # fc1.bias
    w2 = jax.random.uniform(k3, (10, 32), jnp.float32, -bound2, bound2)  # fc2.weight
    b2 = jax.random.uniform(k4, (10,), jnp.float32, -bound2, bound2)     # fc2.bias
    return w1, b1, w2, b2


if __name__ == "__main__":
    key = jax.random.PRNGKey(0)
    kx, kx2, kp = jax.random.split(key, 3)
    w1, b1, w2, b2 = init_params(kp)

    # Case 1: small batch (grid of one 128-lane tile), default bf16 input path.
    batch = 8
    x = jax.random.normal(kx, (batch, 64), jnp.float32)   # flattened 8x8 digit images
    out = jax.block_until_ready(digit_classifier_forward(x, w1, b1, w2, b2))
    ref = jnp.maximum(x @ w1.T + b1, 0.0) @ w2.T + b2
    assert out.shape == (batch, 10)
    assert jnp.allclose(out, ref, atol=5e-2, rtol=5e-2), float(jnp.max(jnp.abs(out - ref)))

    # Same batch, full-f32 path -> exact match with the reference.
    out_f32 = jax.block_until_ready(
        digit_classifier_forward(x, w1, b1, w2, b2, compute_dtype=jnp.float32))
    assert jnp.allclose(out_f32, ref, atol=1e-5, rtol=1e-5)

    # Case 2: non-multiple batch with a multi-step grid (exercises tiling + padding).
    batch2 = 300
    x2 = jax.random.normal(kx2, (batch2, 64), jnp.float32)
    out2 = jax.block_until_ready(
        digit_classifier_forward(x2, w1, b1, w2, b2, block_batch=128))
    ref2 = jnp.maximum(x2 @ w1.T + b1, 0.0) @ w2.T + b2
    assert out2.shape == (batch2, 10)
    assert jnp.allclose(out2, ref2, atol=5e-2, rtol=5e-2), float(jnp.max(jnp.abs(out2 - ref2)))

    print("KERNEL_OK")
</pallas_src>

<mosaic_0001>
module attributes {stable_mosaic.version = 11 : i64} {
  func.func @_mlp_kernel(%arg0: i32, %arg1: memref<64x128xbf16, #tpu.memory_space<vmem>>, %arg2: memref<32x64xbf16, #tpu.memory_space<vmem>>, %arg3: memref<32x1xf32, #tpu.memory_space<vmem>>, %arg4: memref<10x32xbf16, #tpu.memory_space<vmem>>, %arg5: memref<10x1xf32, #tpu.memory_space<vmem>>, %arg6: memref<10x128xf32, #tpu.memory_space<vmem>>) attributes {dimension_semantics = [#tpu.dimension_semantics<parallel>], iteration_bounds = array<i64: 1>, scalar_prefetch = 0 : i64, scratch_operands = 0 : i64, tpu.core_type = #tpu.core_type<tc>, window_params = [{transform_indices = @transform_0, window_bounds = array<i64: 64, 128>}, {pipeline_mode = #tpu.pipeline_mode<synchronous>, transform_indices = @transform_1, window_bounds = array<i64: 32, 64>}, {pipeline_mode = #tpu.pipeline_mode<synchronous>, transform_indices = @transform_2, window_bounds = array<i64: 32, 1>}, {pipeline_mode = #tpu.pipeline_mode<synchronous>, transform_indices = @transform_3, window_bounds = array<i64: 10, 32>}, {pipeline_mode = #tpu.pipeline_mode<synchronous>, transform_indices = @transform_4, window_bounds = array<i64: 10, 1>}, {transform_indices = @transform_5, window_bounds = array<i64: 10, 128>}]} {
    %c0 = arith.constant 0 : index
    %c0_0 = arith.constant 0 : index
    %0 = vector.load %arg2[%c0, %c0_0] : memref<32x64xbf16, #tpu.memory_space<vmem>>, vector<32x64xbf16>
    %c0_1 = arith.constant 0 : index
    %c0_2 = arith.constant 0 : index
    %1 = vector.load %arg1[%c0_1, %c0_2] : memref<64x128xbf16, #tpu.memory_space<vmem>>, vector<64x128xbf16>
    %cst = arith.constant dense<0.000000e+00> : vector<32x128xf32>
    %2 = tpu.matmul %0, %1, %cst {dimension_numbers = #tpu.dot_dimension_numbers<[1], [0], [0], [1], [0, 0, 1, 1], [], []>} : vector<32x64xbf16>, vector<64x128xbf16>, vector<32x128xf32> -> vector<32x128xf32>
    %c0_3 = arith.constant 0 : index
    %c0_4 = arith.constant 0 : index
    %3 = vector.load %arg3[%c0_3, %c0_4] : memref<32x1xf32, #tpu.memory_space<vmem>>, vector<32x1xf32>
    %4 = vector.broadcast %3 : vector<32x1xf32> to vector<32x128xf32>
    %5 = arith.addf %2, %4 : vector<32x128xf32>
    %cst_5 = arith.constant 0.000000e+00 : f32
    %6 = vector.broadcast %cst_5 : f32 to vector<32x128xf32>
    %7 = arith.maximumf %5, %6 : vector<32x128xf32>
    %8 = arith.truncf %7 : vector<32x128xf32> to vector<32x128xbf16>
    %c0_6 = arith.constant 0 : index
    %c0_7 = arith.constant 0 : index
    %9 = vector.load %arg4[%c0_6, %c0_7] : memref<10x32xbf16, #tpu.memory_space<vmem>>, vector<10x32xbf16>
    %cst_8 = arith.constant dense<0.000000e+00> : vector<10x128xf32>
    %10 = tpu.matmul %9, %8, %cst_8 {dimension_numbers = #tpu.dot_dimension_numbers<[1], [0], [0], [1], [0, 0, 1, 1], [], []>} : vector<10x32xbf16>, vector<32x128xbf16>, vector<10x128xf32> -> vector<10x128xf32>
    %c0_9 = arith.constant 0 : index
    %c0_10 = arith.constant 0 : index
    %11 = vector.load %arg5[%c0_9, %c0_10] : memref<10x1xf32, #tpu.memory_space<vmem>>, vector<10x1xf32>
    %12 = vector.broadcast %11 : vector<10x1xf32> to vector<10x128xf32>
    %13 = arith.addf %10, %12 : vector<10x128xf32>
    %c0_11 = arith.constant 0 : index
    %c0_12 = arith.constant 0 : index
    %14 = vector.load %arg6[%c0_11, %c0_12] : memref<10x128xf32, #tpu.memory_space<vmem>>, vector<10x128xf32>
    tpu.vector_store %arg6[%c0_11, %c0_12], %13 {strides = array<i32>} : memref<10x128xf32, #tpu.memory_space<vmem>>, vector<10x128xf32>,
    return
  }
  func.func @transform_0(%arg0: i32) -> (i32, i32) {
    %c0_i32 = arith.constant 0 : i32
    %c0_i32_0 = arith.constant 0 : i32
    return %c0_i32, %arg0 : i32, i32
  }
  func.func @transform_1(%arg0: i32) -> (i32, i32) {
    %c0_i32 = arith.constant 0 : i32
    %c0_i32_0 = arith.constant 0 : i32
    %c0_i32_1 = arith.constant 0 : i32
    return %c0_i32, %c0_i32_0 : i32, i32
  }
  func.func @transform_2(%arg0: i32) -> (i32, i32) {
    %c0_i32 = arith.constant 0 : i32
    %c0_i32_0 = arith.constant 0 : i32
    %c0_i32_1 = arith.constant 0 : i32
    return %c0_i32, %c0_i32_0 : i32, i32
  }
  func.func @transform_3(%arg0: i32) -> (i32, i32) {
    %c0_i32 = arith.constant 0 : i32
    %c0_i32_0 = arith.constant 0 : i32
    %c0_i32_1 = arith.constant 0 : i32
    return %c0_i32, %c0_i32_0 : i32, i32
  }
  func.func @transform_4(%arg0: i32) -> (i32, i32) {
    %c0_i32 = arith.constant 0 : i32
    %c0_i32_0 = arith.constant 0 : i32
    %c0_i32_1 = arith.constant 0 : i32
    return %c0_i32, %c0_i32_0 : i32, i32
  }
  func.func @transform_5(%arg0: i32) -> (i32, i32) {
    %c0_i32 = arith.constant 0 : i32
    %c0_i32_0 = arith.constant 0 : i32
    return %c0_i32, %arg0 : i32, i32
  }
}

</mosaic_0001>

<llo_original>
// kernel: tpu_custom_call.1
$region0: #{tpu_custom_call.1}
  #allocation0 [shape = 'u32[]', space=smem, size = 0x4, offset = 0x4, fixed_abs, tag = 'smem constant byte address 0x4 - core index']
  #allocation1 [shape = 'u32[144,128]{1,0:T(1,128)}', space=vmem, size = 0x12000, scoped, tag = 'internal scratch']
  %s0 = inlined_call_operand.vmem [shape: bf16[64,128], index: 0, kind: input, shape index: {}]
  %s1 = inlined_call_operand.vmem [shape: bf16[32,64], index: 1, kind: input, shape index: {}]
  %s2 = inlined_call_operand.vmem [shape: f32[32,1], index: 2, kind: input, shape index: {}]
  %s3 = inlined_call_operand.vmem [shape: bf16[10,32], index: 3, kind: input, shape index: {}]
  %s4 = inlined_call_operand.vmem [shape: f32[10,1], index: 4, kind: input, shape index: {}]
  %s5 = inlined_call_operand.hbm [shape: f32[10,128], index: 5, kind: output, shape index: {}]
  %s6 = sld [smem:[#allocation0]]
  $region30: #{tpu_custom_call.1} parent=0
    _
  %s8 = ssub.s32 1, %s6
  %s9 = scalar_select 0, %s8, %s6
  $region1: #{tpu_custom_call.1} parent=0
    #allocation2 [shape = 'u8[8192]{0}', space=vmem, size = 0x2000, scoped, tag = 'output window, operand 0, single buffered']
    #allocation3 [shape = 's32[1]{0}', space=sflag, size = 0x4, scoped, tag = 'scoped memory for tpu_custom_call.1']
    %10 = vsyncpa [#allocation3], 0
    // Predicated region
    $region2: #{tpu_custom_call.1} parent=1 // pred_check
      _
    $region3: #{tpu_custom_call.1} parent=1 // pred_check_branch
      %12 = sbr.rel (0) target = $region5
    $region4: #{tpu_custom_call.1} parent=1 // pred_region
      _
    $region5: #{tpu_custom_call.1} parent=1 // pred_fallthru
      _
    // Predicated region
    $region6: #{tpu_custom_call.1} parent=1 // pred_check
      _
    $region7: #{tpu_custom_call.1} parent=1 // pred_check_branch
      %14 = sbr.rel (0) target = $region9
    $region8: #{tpu_custom_call.1} parent=1 // pred_region
      _
    $region9: #{tpu_custom_call.1} parent=1 // pred_fallthru
      _
    // Predicated region
    $region10: #{tpu_custom_call.1} parent=1 // pred_check
      _
    $region11: #{tpu_custom_call.1} parent=1 // pred_check_branch
      %16 = sbr.rel (0) target = $region13
    $region12: #{tpu_custom_call.1} parent=1 // pred_region
      _
    $region13: #{tpu_custom_call.1} parent=1 // pred_fallthru
      _
    // Predicated region
    $region14: #{tpu_custom_call.1} parent=1 // pred_check
      _
    $region15: #{tpu_custom_call.1} parent=1 // pred_check_branch
      %18 = sbr.rel (0) target = $region17
    $region16: #{tpu_custom_call.1} parent=1 // pred_region
      _
    $region17: #{tpu_custom_call.1} parent=1 // pred_fallthru
      _
    // Predicated region
    $region18: #{tpu_custom_call.1} parent=1 // pred_check
      _
    $region19: #{tpu_custom_call.1} parent=1 // pred_check_branch
      %20 = sbr.rel (0) target = $region21
    $region20: #{tpu_custom_call.1} parent=1 // pred_region
      _
    $region21: #{tpu_custom_call.1} parent=1 // pred_fallthru
      _
    %v22 = vld [vmem:[%s1] sm:$0xf]
    %v23 = vld [vmem:[%s1 + $0x4] sm:$0xf]
    %v24 = vld [vmem:[%s1 + $0x8] sm:$0xf]
    %v25 = vld [vmem:[%s1 + $0xc] sm:$0xf]
    %v26 = vld [vmem:[%s0] sm:$0xf]
    %v27 = vld [vmem:[%s0 + $0x4] sm:$0xf]
    %v28 = vld [vmem:[%s0 + $0x8] sm:$0xf]
    %v29 = vld [vmem:[%s0 + $0xc] sm:$0xf]
    %v30 = vld [vmem:[%s0 + $0x10] sm:$0xf]
    %v31 = vld [vmem:[%s0 + $0x14] sm:$0xf]
    %v32 = vld [vmem:[%s0 + $0x18] sm:$0xf]
    %v33 = vld [vmem:[%s0 + $0x1c] sm:$0xf]
    %v34 = vld [vmem:[%s2] sm:$0xff]
    %v35 = vld [vmem:[%s2 + $0x8] sm:$0xff]
    %v36 = vld [vmem:[%s2 + $0x10] sm:$0xff]
    %v37 = vld [vmem:[%s2 + $0x18] sm:$0xff]
    %39 = vset.pattern.permute.xlu0 0
    %40 = vperm.xlu0 %39, %v34
    %v41 = vpop.permute.xlu0 %40
    %44 = vset.pattern.permute.xlu0 0
    %45 = vperm.xlu0 %44, %v35
    %v46 = vpop.permute.xlu0 %45
    %49 = vset.pattern.permute.xlu0 0
    %50 = vperm.xlu0 %49, %v36
    %v51 = vpop.permute.xlu0 %50
    %54 = vset.pattern.permute.xlu0 0
    %55 = vperm.xlu0 %54, %v37
    %v56 = vpop.permute.xlu0 %55
    %v62 = vunpack.c.l.b16 %v22
    %v63 = vunpack.c.l.b16 %v23
    %v64 = vunpack.c.l.b16 %v24
    %v65 = vunpack.c.l.b16 %v25
    %v66 = vpack.c.b16 %v63, %v62
    %v67 = vpack.c.b16 %v65, %v64
    %v76 = vunpack.c.l.b16 %v26
    %v77 = vunpack.c.l.b16 %v27
    %v78 = vunpack.c.l.b16 %v28
    %v79 = vunpack.c.l.b16 %v29
    %v80 = vunpack.c.l.b16 %v30
    %v81 = vunpack.c.l.b16 %v31
    %v82 = vunpack.c.l.b16 %v32
    %v83 = vunpack.c.l.b16 %v33
    %v84 = vpack.c.b16 %v77, %v76
    %v85 = vpack.c.b16 %v79, %v78
    %v86 = vpack.c.b16 %v81, %v80
    %v87 = vpack.c.b16 %v83, %v82
    %vm92 = vcmask 523264
    %v94 = vsel %vm92, %v66, 0
    %v97 = vsel %vm92, %v67, 0
    %99 = vmatprep.subr.bf16.mxu0 0
    %100 = vmatpush1.bf16.msra.mxu0 %v84
    %101 = vmatprep.subr.bf16.mxu0 0
    %102 = vmatpush1.bf16.msra.mxu0 %v85
    %103 = vmatprep.subr.bf16.mxu0 0
    %104 = vmatpush1.bf16.msra.mxu0 %v86
    %105 = vmatprep.subr.bf16.mxu0 0
    %106 = vmatpush1.bf16.msra.mxu0 %v87
    %107 = vmatprep.subr.bf16.mxu0 0
    %108 = vmatpush1.bf16.msra.mxu0 0
    %109 = vmatprep.subr.bf16.mxu0 0
    %110 = vmatpush1.bf16.msra.mxu0 0
    %111 = vmatprep.subr.bf16.mxu0 0
    %112 = vmatpush1.bf16.msra.mxu0 0
    %113 = vmatprep.subr.bf16.mxu0 0
    %114 = vmatpush1.bf16.msra.mxu0 0
    %115 = vmatprep.subr.bf16.mxu0 0
    %116 = vmatpush1.bf16.msra.mxu0 0
    %117 = vmatprep.subr.bf16.mxu0 0
    %118 = vmatpush1.bf16.msra.mxu0 0
    %119 = vmatprep.subr.bf16.mxu0 0
    %120 = vmatpush1.bf16.msra.mxu0 0
    %121 = vmatprep.subr.bf16.mxu0 0
    %122 = vmatpush1.bf16.msra.mxu0 0
    %123 = vmatprep.subr.bf16.mxu0 0
    %124 = vmatpush1.bf16.msra.mxu0 0
    %125 = vmatprep.subr.bf16.mxu0 0
    %126 = vmatpush1.bf16.msra.mxu0 0
    %127 = vmatprep.subr.bf16.mxu0 0
    %128 = vmatpush1.bf16.msra.mxu0 0
    %129 = vmatprep.subr.bf16.mxu0 0
    %130 = vmatpush1.bf16.msra.mxu0 0
    %131 = vmatprep.mubr.bf16.mxu0 0
    %132 = vmatmul.mubr.bf16.gmra.mrb[0].mxu0 %v94
    %v133 = vpop.f32.mrb[0].mxu0
    %v134 = vadd.f32 %v41, %v133
    %v135 = vpop.f32.mrb[0].mxu0
    %v136 = vpop.f32.mrb[0].mxu0
    %v137 = vadd.f32 %v46, %v136
    %v138 = vpop.f32.mrb[0].mxu0
    %139 = vmatprep.mubr.bf16.mxu0 0
    %140 = vmatmul.mubr.bf16.gmra.mrb[0].mxu0 %v97
    %v141 = vpop.f32.mrb[0].mxu0
    %v142 = vadd.f32 %v51, %v141
    %v143 = vpop.f32.mrb[0].mxu0
    %v144 = vpop.f32.mrb[0].mxu0
    %v145 = vadd.f32 %v56, %v144
    %v146 = vpop.f32.mrb[0].mxu0
    %147 = vdwg.mxu0
    %v148 = vmax.f32 %v134, 0.0
    %v149 = vmax.f32 %v137, 0.0
    %v150 = vmax.f32 %v142, 0.0
    %v151 = vmax.f32 %v145, 0.0
    %v152 = vpack.c.bf16 %v149, %v148
    %v153 = vpack.c.bf16 %v151, %v150
    %v154 = vld [vmem:[%s3] sm:$0xf]
    %v155 = vld [vmem:[%s3 + $0x4] sm:$0x1]
    %v156 = vld [vmem:[%s4] sm:$0xff]
    %v157 = vld [vmem:[%s4 + $0x8] sm:$0x3]
    %159 = vset.pattern.permute.xlu0 0
    %160 = vperm.xlu0 %159, %v156
    %v161 = vpop.permute.xlu0 %160
    %164 = vset.pattern.permute.xlu0 0
    %165 = vperm.xlu0 %164, %v157
    %v166 = vpop.permute.xlu0 %165
    %v170 = vunpack.c.l.b16 %v154
    %v171 = vunpack.c.l.b16 %v155
    %v172 = vpack.c.b16 %v171, %v170
    %vm173 = vcmask 261120
    %v175 = vsel %vm173, %v172, 0
    %177 = vmatprep.subr.bf16.mxu0 0
    %178 = vmatpush1.bf16.msra.mxu0 %v152
    %179 = vmatprep.subr.bf16.mxu0 0
    %180 = vmatpush1.bf16.msra.mxu0 %v153
    %181 = vmatprep.subr.bf16.mxu0 0
    %182 = vmatpush1.bf16.msra.mxu0 0
    %183 = vmatprep.subr.bf16.mxu0 0
    %184 = vmatpush1.bf16.msra.mxu0 0
    %185 = vmatprep.subr.bf16.mxu0 0
    %186 = vmatpush1.bf16.msra.mxu0 0
    %187 = vmatprep.subr.bf16.mxu0 0
    %188 = vmatpush1.bf16.msra.mxu0 0
    %189 = vmatprep.subr.bf16.mxu0 0
    %190 = vmatpush1.bf16.msra.mxu0 0
    %191 = vmatprep.subr.bf16.mxu0 0
    %192 = vmatpush1.bf16.msra.mxu0 0
    %193 = vmatprep.subr.bf16.mxu0 0
    %194 = vmatpush1.bf16.msra.mxu0 0
    %195 = vmatprep.subr.bf16.mxu0 0
    %196 = vmatpush1.bf16.msra.mxu0 0
    %197 = vmatprep.subr.bf16.mxu0 0
    %198 = vmatpush1.bf16.msra.mxu0 0
    %199 = vmatprep.subr.bf16.mxu0 0
    %200 = vmatpush1.bf16.msra.mxu0 0
    %201 = vmatprep.subr.bf16.mxu0 0
    %202 = vmatpush1.bf16.msra.mxu0 0
    %203 = vmatprep.subr.bf16.mxu0 0
    %204 = vmatpush1.bf16.msra.mxu0 0
    %205 = vmatprep.subr.bf16.mxu0 0
    %206 = vmatpush1.bf16.msra.mxu0 0
    %207 = vmatprep.subr.bf16.mxu0 0
    %208 = vmatpush1.bf16.msra.mxu0 0
    %209 = vmatprep.mubr.bf16.mxu0 0
    %210 = vmatmul.mubr.bf16.gmra.mrb[0].mxu0 %v175
    %v211 = vpop.f32.mrb[0].mxu0
    %v212 = vadd.f32 %v161, %v211
    %v213 = vpop.f32.mrb[0].mxu0
    %v214 = vpop.f32.mrb[0].mxu0
    %v215 = vadd.f32 %v166, %v214
    %v216 = vpop.f32.mrb[0].mxu0
    %217 = vdwg.mxu0
    %218 = vst [vmem:[#allocation2] sm:$0xff] %v212
    %219 = vst [vmem:[#allocation2 + $0x8] sm:$0x3] %v215
    // Predicated region
    $region22: #{tpu_custom_call.1} parent=1 // pred_check
      _
    $region23: #{tpu_custom_call.1} parent=1 // pred_check_branch
      %221 = sbr.rel (0) target = $region25
    $region24: #{tpu_custom_call.1} parent=1 // pred_region
      %s223 = ssub.s32 256, 256
      %224 = vsyncadd [#allocation3], %s223
      %s225 = sshll.u32 [#allocation2], 4
      %s226 = int_to_ptr.vmem [resolvable:$true] %s225
      %231 = dma.vmem_to_hbm [thread:$0]  %s226, 256, %s5, [#allocation3], 128, 128, 8
    $region25: #{tpu_custom_call.1} parent=1 // pred_fallthru
      _
    // Predicated region
    $region26: #{tpu_custom_call.1} parent=1 // pred_check
      _
    $region27: #{tpu_custom_call.1} parent=1 // pred_check_branch
      %233 = sbr.rel (0) target = $region29
    $region28: #{tpu_custom_call.1} parent=1 // pred_region
      %234 = dma.done [#allocation3], 256
    $region29: #{tpu_custom_call.1} parent=1 // pred_fallthru
      _
    %235 = vsyncpa [#allocation3], 1

</llo_original>
